<compile_context>
chip_gen: v5e
topology: v5e:2x2
jax: 0.10.0
libtpu: 0.0.40
codegen_flags: <defaults>
</compile_context>

<pallas_src>
import math
import numpy as np
import jax
import jax.numpy as jnp
from jax.experimental import pallas as pl
from jax.experimental.pallas import tpu as pltpu


# ----------------------------- Pallas kernel -------------------------------- #
def static_embedding_kernel(x_ref, w0_ref, w1_ref, b1_ref, w2_ref, b2_ref,
                            w3_ref, b3_ref, o_ref):
    # x_ref  : [TM, 7]   f32
    # w0_ref : [7, 512]  f32   (static_embed, bias=False) -- used on the VPU
    # w1_ref : [512, 256] bf16, b1_ref: [1, 256] bf16
    # w2_ref : [256, 128] bf16, b2_ref: [1, 128] bf16
    # w3_ref : [128, 128] bf16, b3_ref: [1, 128] bf16   (lane-dense padded)
    # o_ref  : [TM, 128] bf16
    #
    # Layer 0 on the VPU: K=7 contraction as 7 unrolled broadcast FMAs
    # (MXU would pad K to 128/256 and waste ~1/3 of its pushes here).
    x = x_ref[...]                                    # [TM, 7]  f32
    w0 = w0_ref[...]                                  # [7, 512] f32
    h = x[:, 0:1] * w0[0:1, :]
    for k in range(1, 7):                             # static unroll at trace time
        h = h + x[:, k:k + 1] * w0[k:k + 1, :]
    h = jnp.maximum(h, 0.0)
    # TODO(synk): nn.Dropout(p=0.2) after each ReLU is inference-mode identity
    # (no random masking); diverges from PyTorch training-mode semantics.

    # Layers 1-3 on the MXU: bf16 operands, f32 accumulation.
    h = jnp.dot(h.astype(jnp.bfloat16), w1_ref[...],
                preferred_element_type=jnp.float32) + b1_ref[...]
    h = jnp.maximum(h, 0.0)
    h = jnp.dot(h.astype(jnp.bfloat16), w2_ref[...],
                preferred_element_type=jnp.float32) + b2_ref[...]
    h = jnp.maximum(h, 0.0)
    h = jnp.dot(h.astype(jnp.bfloat16), w3_ref[...],
                preferred_element_type=jnp.float32) + b3_ref[...]
    h = jnp.maximum(h, 0.0)
    o_ref[...] = h.astype(o_ref.dtype)


def _round_up(a, b):
    return (a + b - 1) // b * b


def static_embedding_pallas(x2d, w0, w1, b1, w2, b2, w3p, b3p, *, tm=1024):
    """x2d: [M, 7] f32 -> [M, D_PAD] bf16 (padded last layer; slice outside)."""
    M, K = x2d.shape
    D0 = w0.shape[1]
    D1 = w1.shape[1]
    D2 = w2.shape[1]
    DP = w3p.shape[1]

    # bf16 operands for the MXU layers (accumulation stays f32 in the kernel);
    # layer-0 weight stays f32 since it runs on the VPU (exact, and v5e's VPU
    # has no bf16 path anyway). x stays f32 for the same reason (7 cols, tiny).
    x2d = x2d.astype(jnp.float32)
    w0 = w0.astype(jnp.float32)
    w1 = w1.astype(jnp.bfloat16)
    b1 = b1.astype(jnp.bfloat16)
    w2 = w2.astype(jnp.bfloat16)
    b2 = b2.astype(jnp.bfloat16)
    w3p = w3p.astype(jnp.bfloat16)
    b3p = b3p.astype(jnp.bfloat16)

    # Row tiling: pad M up to a multiple of the (8-aligned) tile. Large M keeps
    # many grid steps on the "parallel" axis (megacore / v7x 2-TC friendly);
    # small M collapses to a single small tile with zero-padded rows.
    tm = min(tm, _round_up(M, 8))
    Mp = _round_up(M, tm)
    if Mp != M:
        x2d = jnp.pad(x2d, ((0, Mp - M), (0, 0)))
    grid = (Mp // tm,)

    flops = 2 * Mp * (K * D0 + D0 * D1 + D1 * D2 + D2 * DP)
    bytes_accessed = (Mp * K * 4 + K * D0 * 4
                      + (D0 * D1 + D1 + D1 * D2 + D2 + D2 * DP + DP) * 2
                      + Mp * DP * 2)

    out = pl.pallas_call(
        static_embedding_kernel,
        out_shape=jax.ShapeDtypeStruct((Mp, DP), jnp.bfloat16),
        grid=grid,
        in_specs=[
            pl.BlockSpec((tm, K), lambda i: (i, 0)),
            # weights / biases: constant index_map -> resident in VMEM
            pl.BlockSpec((K, D0), lambda i: (0, 0)),
            pl.BlockSpec((D0, D1), lambda i: (0, 0)),
            pl.BlockSpec((1, D1), lambda i: (0, 0)),
            pl.BlockSpec((D1, D2), lambda i: (0, 0)),
            pl.BlockSpec((1, D2), lambda i: (0, 0)),
            pl.BlockSpec((D2, DP), lambda i: (0, 0)),
            pl.BlockSpec((1, DP), lambda i: (0, 0)),
        ],
        out_specs=pl.BlockSpec((tm, DP), lambda i: (i, 0)),
        compiler_params=pltpu.CompilerParams(
            dimension_semantics=("parallel",),
            vmem_limit_bytes=32 * 1024 * 1024),
        cost_estimate=pl.CostEstimate(
            flops=flops, transcendentals=0, bytes_accessed=bytes_accessed),
    )(x2d, w0, w1, b1, w2, b2, w3p, b3p)
    return out[:M]


# -------------------------------- driver ------------------------------------ #
if __name__ == "__main__":
    B, L = 2, 8                  # small leading dims; module acts on last dim
    D_INP, D_OUT = 7, 512        # module defaults: d_inp=7, d_output=512
    H1, H2 = 256, 128            # hard-coded hidden sizes in the module
    LANE = 128
    D_PAD = ((D_INP + LANE - 1) // LANE) * LANE   # lane-dense padded output (=128)

    key = jax.random.PRNGKey(0)
    k_x, k0, k1, kb1, k2, kb2, k3, kb3 = jax.random.split(key, 8)

    # inputs
    x = jax.random.normal(k_x, (B, L, D_INP), dtype=jnp.float32)

    # PyTorch nn.Linear default init: U(-1/sqrt(fan_in), 1/sqrt(fan_in)).
    # Weights are stored transposed ([in, out]) for the in-kernel x @ W layout.
    def lin_w(k, fan_in, fan_out):
        bound = 1.0 / math.sqrt(fan_in)
        return jax.random.uniform(k, (fan_in, fan_out), jnp.float32, -bound, bound)

    def lin_b(k, fan_in, fan_out):
        bound = 1.0 / math.sqrt(fan_in)
        return jax.random.uniform(k, (1, fan_out), jnp.float32, -bound, bound)

    w0 = lin_w(k0, D_INP, D_OUT)                            # static_embed (bias=False)
    w1, b1 = lin_w(k1, D_OUT, H1), lin_b(kb1, D_OUT, H1)    # static_embedL1
    w2, b2 = lin_w(k2, H1, H2), lin_b(kb2, H1, H2)          # static_embedL2
    w3, b3 = lin_w(k3, H2, D_INP), lin_b(kb3, H2, D_INP)    # static_embedL3

    # pad last layer to a lane-dense output width (zeros -> exact same result)
    w3p = jnp.zeros((H2, D_PAD), jnp.float32).at[:, :D_INP].set(w3)
    b3p = jnp.zeros((1, D_PAD), jnp.float32).at[:, :D_INP].set(b3)

    # run the fused Pallas kernel
    x2d = x.reshape(B * L, D_INP)
    out_pad = static_embedding_pallas(x2d, w0, w1, b1, w2, b2, w3p, b3p)
    out_pad = jax.block_until_ready(out_pad)
    out = np.asarray(out_pad.astype(jnp.float32))[:, :D_INP].reshape(B, L, D_INP)

    # pure numpy f32 reference (dropout = identity in eval mode)
    def relu(a):
        return np.maximum(a, 0.0)

    xr = np.asarray(x2d, dtype=np.float32)
    ref = relu(xr @ np.asarray(w0))
    ref = relu(ref @ np.asarray(w1) + np.asarray(b1))
    ref = relu(ref @ np.asarray(w2) + np.asarray(b2))
    ref = relu(ref @ np.asarray(w3) + np.asarray(b3))
    ref = ref.reshape(B, L, D_INP)

    assert out.shape == (B, L, D_INP)
    # tolerance accounts for bf16 MXU operands + bf16 output store (f32 accum)
    assert np.allclose(out, ref, atol=3e-2, rtol=3e-2), "mismatch vs reference"

    print("KERNEL_OK")
</pallas_src>

<mosaic_0001>
module attributes {stable_mosaic.version = 11 : i64} {
  func.func @static_embedding_kernel(%arg0: i32, %arg1: memref<16x7xf32, #tpu.memory_space<vmem>>, %arg2: memref<7x512xf32, #tpu.memory_space<vmem>>, %arg3: memref<512x256xbf16, #tpu.memory_space<vmem>>, %arg4: memref<1x256xbf16, #tpu.memory_space<vmem>>, %arg5: memref<256x128xbf16, #tpu.memory_space<vmem>>, %arg6: memref<1x128xbf16, #tpu.memory_space<vmem>>, %arg7: memref<128x128xbf16, #tpu.memory_space<vmem>>, %arg8: memref<1x128xbf16, #tpu.memory_space<vmem>>, %arg9: memref<16x128xbf16, #tpu.memory_space<vmem>>) attributes {dimension_semantics = [#tpu.dimension_semantics<parallel>], iteration_bounds = array<i64: 1>, scalar_prefetch = 0 : i64, scratch_operands = 0 : i64, tpu.core_type = #tpu.core_type<tc>, window_params = [{transform_indices = @transform_0, window_bounds = array<i64: 16, 7>}, {pipeline_mode = #tpu.pipeline_mode<synchronous>, transform_indices = @transform_1, window_bounds = array<i64: 7, 512>}, {pipeline_mode = #tpu.pipeline_mode<synchronous>, transform_indices = @transform_2, window_bounds = array<i64: 512, 256>}, {pipeline_mode = #tpu.pipeline_mode<synchronous>, transform_indices = @transform_3, window_bounds = array<i64: 1, 256>}, {pipeline_mode = #tpu.pipeline_mode<synchronous>, transform_indices = @transform_4, window_bounds = array<i64: 256, 128>}, {pipeline_mode = #tpu.pipeline_mode<synchronous>, transform_indices = @transform_5, window_bounds = array<i64: 1, 128>}, {pipeline_mode = #tpu.pipeline_mode<synchronous>, transform_indices = @transform_6, window_bounds = array<i64: 128, 128>}, {pipeline_mode = #tpu.pipeline_mode<synchronous>, transform_indices = @transform_7, window_bounds = array<i64: 1, 128>}, {transform_indices = @transform_8, window_bounds = array<i64: 16, 128>}]} {
    %c0 = arith.constant 0 : index
    %c0_0 = arith.constant 0 : index
    %0 = vector.load %arg1[%c0, %c0_0] : memref<16x7xf32, #tpu.memory_space<vmem>>, vector<16x7xf32>
    %c0_1 = arith.constant 0 : index
    %c0_2 = arith.constant 0 : index
    %1 = vector.load %arg2[%c0_1, %c0_2] : memref<7x512xf32, #tpu.memory_space<vmem>>, vector<7x512xf32>
    %2 = vector.extract_strided_slice %0 {offsets = [0, 0], sizes = [16, 1], strides = [1, 1]} : vector<16x7xf32> to vector<16x1xf32>
    %3 = vector.extract_strided_slice %1 {offsets = [0, 0], sizes = [1, 512], strides = [1, 1]} : vector<7x512xf32> to vector<1x512xf32>
    %4 = vector.broadcast %2 : vector<16x1xf32> to vector<16x512xf32>
    %5 = vector.broadcast %3 : vector<1x512xf32> to vector<16x512xf32>
    %6 = arith.mulf %4, %5 : vector<16x512xf32>
    %7 = vector.extract_strided_slice %0 {offsets = [0, 1], sizes = [16, 1], strides = [1, 1]} : vector<16x7xf32> to vector<16x1xf32>
    %8 = vector.extract_strided_slice %1 {offsets = [1, 0], sizes = [1, 512], strides = [1, 1]} : vector<7x512xf32> to vector<1x512xf32>
    %9 = vector.broadcast %7 : vector<16x1xf32> to vector<16x512xf32>
    %10 = vector.broadcast %8 : vector<1x512xf32> to vector<16x512xf32>
    %11 = arith.mulf %9, %10 : vector<16x512xf32>
    %12 = arith.addf %6, %11 : vector<16x512xf32>
    %13 = vector.extract_strided_slice %0 {offsets = [0, 2], sizes = [16, 1], strides = [1, 1]} : vector<16x7xf32> to vector<16x1xf32>
    %14 = vector.extract_strided_slice %1 {offsets = [2, 0], sizes = [1, 512], strides = [1, 1]} : vector<7x512xf32> to vector<1x512xf32>
    %15 = vector.broadcast %13 : vector<16x1xf32> to vector<16x512xf32>
    %16 = vector.broadcast %14 : vector<1x512xf32> to vector<16x512xf32>
    %17 = arith.mulf %15, %16 : vector<16x512xf32>
    %18 = arith.addf %12, %17 : vector<16x512xf32>
    %19 = vector.extract_strided_slice %0 {offsets = [0, 3], sizes = [16, 1], strides = [1, 1]} : vector<16x7xf32> to vector<16x1xf32>
    %20 = vector.extract_strided_slice %1 {offsets = [3, 0], sizes = [1, 512], strides = [1, 1]} : vector<7x512xf32> to vector<1x512xf32>
    %21 = vector.broadcast %19 : vector<16x1xf32> to vector<16x512xf32>
    %22 = vector.broadcast %20 : vector<1x512xf32> to vector<16x512xf32>
    %23 = arith.mulf %21, %22 : vector<16x512xf32>
    %24 = arith.addf %18, %23 : vector<16x512xf32>
    %25 = vector.extract_strided_slice %0 {offsets = [0, 4], sizes = [16, 1], strides = [1, 1]} : vector<16x7xf32> to vector<16x1xf32>
    %26 = vector.extract_strided_slice %1 {offsets = [4, 0], sizes = [1, 512], strides = [1, 1]} : vector<7x512xf32> to vector<1x512xf32>
    %27 = vector.broadcast %25 : vector<16x1xf32> to vector<16x512xf32>
    %28 = vector.broadcast %26 : vector<1x512xf32> to vector<16x512xf32>
    %29 = arith.mulf %27, %28 : vector<16x512xf32>
    %30 = arith.addf %24, %29 : vector<16x512xf32>
    %31 = vector.extract_strided_slice %0 {offsets = [0, 5], sizes = [16, 1], strides = [1, 1]} : vector<16x7xf32> to vector<16x1xf32>
    %32 = vector.extract_strided_slice %1 {offsets = [5, 0], sizes = [1, 512], strides = [1, 1]} : vector<7x512xf32> to vector<1x512xf32>
    %33 = vector.broadcast %31 : vector<16x1xf32> to vector<16x512xf32>
    %34 = vector.broadcast %32 : vector<1x512xf32> to vector<16x512xf32>
    %35 = arith.mulf %33, %34 : vector<16x512xf32>
    %36 = arith.addf %30, %35 : vector<16x512xf32>
    %37 = vector.extract_strided_slice %0 {offsets = [0, 6], sizes = [16, 1], strides = [1, 1]} : vector<16x7xf32> to vector<16x1xf32>
    %38 = vector.extract_strided_slice %1 {offsets = [6, 0], sizes = [1, 512], strides = [1, 1]} : vector<7x512xf32> to vector<1x512xf32>
    %39 = vector.broadcast %37 : vector<16x1xf32> to vector<16x512xf32>
    %40 = vector.broadcast %38 : vector<1x512xf32> to vector<16x512xf32>
    %41 = arith.mulf %39, %40 : vector<16x512xf32>
    %42 = arith.addf %36, %41 : vector<16x512xf32>
    %cst = arith.constant 0.000000e+00 : f32
    %43 = vector.broadcast %cst : f32 to vector<16x512xf32>
    %44 = arith.maximumf %42, %43 : vector<16x512xf32>
    %45 = arith.truncf %44 : vector<16x512xf32> to vector<16x512xbf16>
    %c0_3 = arith.constant 0 : index
    %c0_4 = arith.constant 0 : index
    %46 = vector.load %arg3[%c0_3, %c0_4] : memref<512x256xbf16, #tpu.memory_space<vmem>>, vector<512x256xbf16>
    %cst_5 = arith.constant dense<0.000000e+00> : vector<16x256xf32>
    %47 = tpu.matmul %45, %46, %cst_5 {dimension_numbers = #tpu.dot_dimension_numbers<[1], [0], [0], [1], [0, 0, 1, 1], [], []>} : vector<16x512xbf16>, vector<512x256xbf16>, vector<16x256xf32> -> vector<16x256xf32>
    %c0_6 = arith.constant 0 : index
    %c0_7 = arith.constant 0 : index
    %48 = vector.load %arg4[%c0_6, %c0_7] : memref<1x256xbf16, #tpu.memory_space<vmem>>, vector<1x256xbf16>
    %49 = arith.extf %48 : vector<1x256xbf16> to vector<1x256xf32>
    %50 = vector.broadcast %49 : vector<1x256xf32> to vector<16x256xf32>
    %51 = arith.addf %47, %50 : vector<16x256xf32>
    %cst_8 = arith.constant 0.000000e+00 : f32
    %52 = vector.broadcast %cst_8 : f32 to vector<16x256xf32>
    %53 = arith.maximumf %51, %52 : vector<16x256xf32>
    %54 = arith.truncf %53 : vector<16x256xf32> to vector<16x256xbf16>
    %c0_9 = arith.constant 0 : index
    %c0_10 = arith.constant 0 : index
    %55 = vector.load %arg5[%c0_9, %c0_10] : memref<256x128xbf16, #tpu.memory_space<vmem>>, vector<256x128xbf16>
    %cst_11 = arith.constant dense<0.000000e+00> : vector<16x128xf32>
    %56 = tpu.matmul %54, %55, %cst_11 {dimension_numbers = #tpu.dot_dimension_numbers<[1], [0], [0], [1], [0, 0, 1, 1], [], []>} : vector<16x256xbf16>, vector<256x128xbf16>, vector<16x128xf32> -> vector<16x128xf32>
    %c0_12 = arith.constant 0 : index
    %c0_13 = arith.constant 0 : index
    %57 = vector.load %arg6[%c0_12, %c0_13] : memref<1x128xbf16, #tpu.memory_space<vmem>>, vector<1x128xbf16>
    %58 = arith.extf %57 : vector<1x128xbf16> to vector<1x128xf32>
    %59 = vector.broadcast %58 : vector<1x128xf32> to vector<16x128xf32>
    %60 = arith.addf %56, %59 : vector<16x128xf32>
    %cst_14 = arith.constant 0.000000e+00 : f32
    %61 = vector.broadcast %cst_14 : f32 to vector<16x128xf32>
    %62 = arith.maximumf %60, %61 : vector<16x128xf32>
    %63 = arith.truncf %62 : vector<16x128xf32> to vector<16x128xbf16>
    %c0_15 = arith.constant 0 : index
    %c0_16 = arith.constant 0 : index
    %64 = vector.load %arg7[%c0_15, %c0_16] : memref<128x128xbf16, #tpu.memory_space<vmem>>, vector<128x128xbf16>
    %cst_17 = arith.constant dense<0.000000e+00> : vector<16x128xf32>
    %65 = tpu.matmul %63, %64, %cst_17 {dimension_numbers = #tpu.dot_dimension_numbers<[1], [0], [0], [1], [0, 0, 1, 1], [], []>} : vector<16x128xbf16>, vector<128x128xbf16>, vector<16x128xf32> -> vector<16x128xf32>
    %c0_18 = arith.constant 0 : index
    %c0_19 = arith.constant 0 : index
    %66 = vector.load %arg8[%c0_18, %c0_19] : memref<1x128xbf16, #tpu.memory_space<vmem>>, vector<1x128xbf16>
    %67 = arith.extf %66 : vector<1x128xbf16> to vector<1x128xf32>
    %68 = vector.broadcast %67 : vector<1x128xf32> to vector<16x128xf32>
    %69 = arith.addf %65, %68 : vector<16x128xf32>
    %cst_20 = arith.constant 0.000000e+00 : f32
    %70 = vector.broadcast %cst_20 : f32 to vector<16x128xf32>
    %71 = arith.maximumf %69, %70 : vector<16x128xf32>
    %72 = arith.truncf %71 : vector<16x128xf32> to vector<16x128xbf16>
    %c0_21 = arith.constant 0 : index
    %c0_22 = arith.constant 0 : index
    %73 = vector.load %arg9[%c0_21, %c0_22] : memref<16x128xbf16, #tpu.memory_space<vmem>>, vector<16x128xbf16>
    tpu.vector_store %arg9[%c0_21, %c0_22], %72 {strides = array<i32>} : memref<16x128xbf16, #tpu.memory_space<vmem>>, vector<16x128xbf16>,
    return
  }
  func.func @transform_0(%arg0: i32) -> (i32, i32) {
    %c0_i32 = arith.constant 0 : i32
    %c0_i32_0 = arith.constant 0 : i32
    return %arg0, %c0_i32 : i32, i32
  }
  func.func @transform_1(%arg0: i32) -> (i32, i32) {
    %c0_i32 = arith.constant 0 : i32
    %c0_i32_0 = arith.constant 0 : i32
    %c0_i32_1 = arith.constant 0 : i32
    return %c0_i32, %c0_i32_0 : i32, i32
  }
  func.func @transform_2(%arg0: i32) -> (i32, i32) {
    %c0_i32 = arith.constant 0 : i32
    %c0_i32_0 = arith.constant 0 : i32
    %c0_i32_1 = arith.constant 0 : i32
    return %c0_i32, %c0_i32_0 : i32, i32
  }
  func.func @transform_3(%arg0: i32) -> (i32, i32) {
    %c0_i32 = arith.constant 0 : i32
    %c0_i32_0 = arith.constant 0 : i32
    %c0_i32_1 = arith.constant 0 : i32
    return %c0_i32, %c0_i32_0 : i32, i32
  }
  func.func @transform_4(%arg0: i32) -> (i32, i32) {
    %c0_i32 = arith.constant 0 : i32
    %c0_i32_0 = arith.constant 0 : i32
    %c0_i32_1 = arith.constant 0 : i32
    return %c0_i32, %c0_i32_0 : i32, i32
  }
  func.func @transform_5(%arg0: i32) -> (i32, i32) {
    %c0_i32 = arith.constant 0 : i32
    %c0_i32_0 = arith.constant 0 : i32
    %c0_i32_1 = arith.constant 0 : i32
    return %c0_i32, %c0_i32_0 : i32, i32
  }
  func.func @transform_6(%arg0: i32) -> (i32, i32) {
    %c0_i32 = arith.constant 0 : i32
    %c0_i32_0 = arith.constant 0 : i32
    %c0_i32_1 = arith.constant 0 : i32
    return %c0_i32, %c0_i32_0 : i32, i32
  }
  func.func @transform_7(%arg0: i32) -> (i32, i32) {
    %c0_i32 = arith.constant 0 : i32
    %c0_i32_0 = arith.constant 0 : i32
    %c0_i32_1 = arith.constant 0 : i32
    return %c0_i32, %c0_i32_0 : i32, i32
  }
  func.func @transform_8(%arg0: i32) -> (i32, i32) {
    %c0_i32 = arith.constant 0 : i32
    %c0_i32_0 = arith.constant 0 : i32
    return %arg0, %c0_i32 : i32, i32
  }
}

</mosaic_0001>

<llo_original>
// kernel: tpu_custom_call.1
$region0: #{tpu_custom_call.1}
  #allocation0 [shape = 'u32[]', space=smem, size = 0x4, offset = 0x4, fixed_abs, tag = 'smem constant byte address 0x4 - core index']
  #allocation1 [shape = 'u32[72,128]{1,0:T(1,128)}', space=vmem, size = 0x9000, scoped, tag = 'internal scratch']
  %s0 = inlined_call_operand.vmem [shape: f32[16,7], index: 0, kind: input, shape index: {}]
  %s1 = inlined_call_operand.hbm [shape: f32[7,512], index: 1, kind: input, shape index: {}]
  %s2 = inlined_call_operand.hbm [shape: bf16[512,256], index: 2, kind: input, shape index: {}]
  %s3 = inlined_call_operand.vmem [shape: bf16[1,256], index: 3, kind: input, shape index: {}]
  %s4 = inlined_call_operand.hbm [shape: bf16[256,128], index: 4, kind: input, shape index: {}]
  %s5 = inlined_call_operand.vmem [shape: bf16[1,128], index: 5, kind: input, shape index: {}]
  %s6 = inlined_call_operand.hbm [shape: bf16[128,128], index: 6, kind: input, shape index: {}]
  %s7 = inlined_call_operand.vmem [shape: bf16[1,128], index: 7, kind: input, shape index: {}]
  %s8 = inlined_call_operand.hbm [shape: bf16[16,128], index: 8, kind: output, shape index: {}]
  %s9 = sld [smem:[#allocation0]]
  $region58: #{tpu_custom_call.1} parent=0
    _
  %s11 = ssub.s32 1, %s9
  %s12 = scalar_select 0, %s11, %s9
  $region1: #{tpu_custom_call.1} parent=0
    #allocation2 [shape = 'u8[16384]{0}', space=vmem, size = 0x4000, scoped, tag = 'input window, operand 1, single buffered']
    #allocation3 [shape = 's32[1]{0}', space=sflag, size = 0x4, scoped, tag = 'scoped memory for tpu_custom_call.1']
    #allocation4 [shape = 's32[1]{0}', space=sflag, size = 0x4, scoped, tag = 'scoped memory for tpu_custom_call.1']
    #allocation5 [shape = 'u8[262144]{0}', space=vmem, size = 0x40000, scoped, tag = 'input window, operand 2, single buffered']
    #allocation6 [shape = 's32[1]{0}', space=sflag, size = 0x4, scoped, tag = 'scoped memory for tpu_custom_call.1']
    #allocation7 [shape = 'u8[65536]{0}', space=vmem, size = 0x10000, scoped, tag = 'input window, operand 4, single buffered']
    #allocation8 [shape = 'u8[32768]{0}', space=vmem, size = 0x8000, scoped, tag = 'input window, operand 6, single buffered']
    #allocation9 [shape = 's32[1]{0}', space=sflag, size = 0x4, scoped, tag = 'scoped memory for tpu_custom_call.1']
    #allocation10 [shape = 'u8[4096]{0}', space=vmem, size = 0x1000, scoped, tag = 'output window, operand 0, single buffered']
    %13 = vsyncpa [#allocation3], 0
    %14 = vsyncpa [#allocation6], 0
    %15 = vsyncpa [#allocation9], 0
    %16 = vsyncpa [#allocation4], 0
    // Predicated region
    $region2: #{tpu_custom_call.1} parent=1 // pred_check
      _
    $region3: #{tpu_custom_call.1} parent=1 // pred_check_branch
      %18 = sbr.rel (0) target = $region5
    $region4: #{tpu_custom_call.1} parent=1 // pred_region
      _
    $region5: #{tpu_custom_call.1} parent=1 // pred_fallthru
      _
    // Predicated region
    $region6: #{tpu_custom_call.1} parent=1 // pred_check
      _
    $region7: #{tpu_custom_call.1} parent=1 // pred_check_branch
      %20 = sbr.rel (0) target = $region9
    $region8: #{tpu_custom_call.1} parent=1 // pred_region
      %22 = vsyncadd [#allocation3], 0
      %s24 = sshll.u32 %s1, 4
      %s25 = int_to_ptr.hbm [resolvable:$true] %s24
      %s26 = sshll.u32 [#allocation2], 4
      %s27 = int_to_ptr.vmem [resolvable:$true] %s26
      %29 = dma.hbm_to_vmem [thread:$0]  %s25, 512, %s27, [#allocation3]
    $region9: #{tpu_custom_call.1} parent=1 // pred_fallthru
      _
    // Predicated region
    $region10: #{tpu_custom_call.1} parent=1 // pred_check
      _
    $region11: #{tpu_custom_call.1} parent=1 // pred_check_branch
      %31 = sbr.rel (0) target = $region13
    $region12: #{tpu_custom_call.1} parent=1 // pred_region
      %33 = vsyncadd [#allocation6], 0
      %s34 = sshll.u32 %s2, 4
      %s35 = int_to_ptr.hbm [resolvable:$true] %s34
      %s36 = sshll.u32 [#allocation5], 4
      %s37 = int_to_ptr.vmem [resolvable:$true] %s36
      %42 = dma.hbm_to_vmem [thread:$0]  %s35, 8192, %s37, [#allocation6], 128, 128, 8
    $region13: #{tpu_custom_call.1} parent=1 // pred_fallthru
      _
    // Predicated region
    $region14: #{tpu_custom_call.1} parent=1 // pred_check
      _
    $region15: #{tpu_custom_call.1} parent=1 // pred_check_branch
      %44 = sbr.rel (0) target = $region17
    $region16: #{tpu_custom_call.1} parent=1 // pred_region
      _
    $region17: #{tpu_custom_call.1} parent=1 // pred_fallthru
      _
    // Predicated region
    $region18: #{tpu_custom_call.1} parent=1 // pred_check
      _
    $region19: #{tpu_custom_call.1} parent=1 // pred_check_branch
      %46 = sbr.rel (0) target = $region21
    $region20: #{tpu_custom_call.1} parent=1 // pred_region
      %48 = vsyncadd [#allocation6], 0
      %s49 = sshll.u32 %s4, 4
      %s50 = int_to_ptr.hbm [resolvable:$true] %s49
      %s51 = sshll.u32 [#allocation7], 4
      %s52 = int_to_ptr.vmem [resolvable:$true] %s51
      %57 = dma.hbm_to_vmem [thread:$0]  %s50, 2048, %s52, [#allocation6], 64, 64, 4
    $region21: #{tpu_custom_call.1} parent=1 // pred_fallthru
      _
    // Predicated region
    $region22: #{tpu_custom_call.1} parent=1 // pred_check
      _
    $region23: #{tpu_custom_call.1} parent=1 // pred_check_branch
      %59 = sbr.rel (0) target = $region25
    $region24: #{tpu_custom_call.1} parent=1 // pred_region
      _
    $region25: #{tpu_custom_call.1} parent=1 // pred_fallthru
      _
    // Predicated region
    $region26: #{tpu_custom_call.1} parent=1 // pred_check
      _
    $region27: #{tpu_custom_call.1} parent=1 // pred_check_branch
      %61 = sbr.rel (0) target = $region29
    $region28: #{tpu_custom_call.1} parent=1 // pred_region
      %63 = vsyncadd [#allocation9], 0
      %s64 = sshll.u32 %s6, 4
      %s65 = int_to_ptr.hbm [resolvable:$true] %s64
      %s66 = sshll.u32 [#allocation8], 4
      %s67 = int_to_ptr.vmem [resolvable:$true] %s66
      %72 = dma.hbm_to_vmem [thread:$0]  %s65, 1024, %s67, [#allocation9], 64, 64, 4
    $region29: #{tpu_custom_call.1} parent=1 // pred_fallthru
      _
    // Predicated region
    $region30: #{tpu_custom_call.1} parent=1 // pred_check
      _
    $region31: #{tpu_custom_call.1} parent=1 // pred_check_branch
      %74 = sbr.rel (0) target = $region33
    $region32: #{tpu_custom_call.1} parent=1 // pred_region
      _
    $region33: #{tpu_custom_call.1} parent=1 // pred_fallthru
      _
    // Predicated region
    $region34: #{tpu_custom_call.1} parent=1 // pred_check
      _
    $region35: #{tpu_custom_call.1} parent=1 // pred_check_branch
      %76 = sbr.rel (0) target = $region37
    $region36: #{tpu_custom_call.1} parent=1 // pred_region
      %78 = dma.done [#allocation3], 512
    $region37: #{tpu_custom_call.1} parent=1 // pred_fallthru
      _
    // Predicated region
    $region38: #{tpu_custom_call.1} parent=1 // pred_check
      _
    $region39: #{tpu_custom_call.1} parent=1 // pred_check_branch
      %80 = sbr.rel (0) target = $region41
    $region40: #{tpu_custom_call.1} parent=1 // pred_region
      %82 = dma.done [#allocation6], 8192
    $region41: #{tpu_custom_call.1} parent=1 // pred_fallthru
      _
    // Predicated region
    $region42: #{tpu_custom_call.1} parent=1 // pred_check
      _
    $region43: #{tpu_custom_call.1} parent=1 // pred_check_branch
      %84 = sbr.rel (0) target = $region45
    $region44: #{tpu_custom_call.1} parent=1 // pred_region
      %86 = dma.done [#allocation6], 2048
    $region45: #{tpu_custom_call.1} parent=1 // pred_fallthru
      _
    // Predicated region
    $region46: #{tpu_custom_call.1} parent=1 // pred_check
      _
    $region47: #{tpu_custom_call.1} parent=1 // pred_check_branch
      %88 = sbr.rel (0) target = $region49
    $region48: #{tpu_custom_call.1} parent=1 // pred_region
      %90 = dma.done [#allocation9], 1024
    $region49: #{tpu_custom_call.1} parent=1 // pred_fallthru
      _
    %v91 = vld [vmem:[%s0] sm:$0xff]
    %v92 = vld [vmem:[%s0 + $0x8] sm:$0xff]
    %v93 = vld [vmem:[#allocation2] sm:$0x7f]
    %v94 = vld [vmem:[#allocation2 + $0x8] sm:$0x7f]
    %v95 = vld [vmem:[#allocation2 + $0x10] sm:$0x7f]
    %v96 = vld [vmem:[#allocation2 + $0x18] sm:$0x7f]
    %98 = vset.pattern.permute.xlu0 0
    %99 = vperm.xlu0 %98, %v91
    %v100 = vpop.permute.xlu0 %99
    %103 = vset.pattern.permute.xlu0 0
    %104 = vperm.xlu0 %103, %v92
    %v105 = vpop.permute.xlu0 %104
    %v107 = vperm.slane %v93, 0
    %v108 = vperm.slane %v94, 0
    %v109 = vperm.slane %v95, 0
    %v110 = vperm.slane %v96, 0
    %v111 = vmul.f32 %v100, %v107
    %v112 = vmul.f32 %v100, %v108
    %v113 = vmul.f32 %v100, %v109
    %v114 = vmul.f32 %v100, %v110
    %v115 = vmul.f32 %v105, %v107
    %v116 = vmul.f32 %v105, %v108
    %v117 = vmul.f32 %v105, %v109
    %v118 = vmul.f32 %v105, %v110
    %119 = vset.pattern.permute.xlu0 1
    %120 = vperm.xlu0 %119, %v91
    %v121 = vpop.permute.xlu0 %120
    %123 = vset.pattern.permute.xlu0 1
    %124 = vperm.xlu0 %123, %v92
    %v125 = vpop.permute.xlu0 %124
    %v127 = vperm.slane %v93, 1
    %v128 = vperm.slane %v94, 1
    %v129 = vperm.slane %v95, 1
    %v130 = vperm.slane %v96, 1
    %v131 = vmul.f32 %v121, %v127
    %v132 = vmul.f32 %v121, %v128
    %v133 = vmul.f32 %v121, %v129
    %v134 = vmul.f32 %v121, %v130
    %v135 = vmul.f32 %v125, %v127
    %v136 = vmul.f32 %v125, %v128
    %v137 = vmul.f32 %v125, %v129
    %v138 = vmul.f32 %v125, %v130
    %v139 = vadd.f32 %v111, %v131
    %v140 = vadd.f32 %v112, %v132
    %v141 = vadd.f32 %v113, %v133
    %v142 = vadd.f32 %v114, %v134
    %v143 = vadd.f32 %v115, %v135
    %v144 = vadd.f32 %v116, %v136
    %v145 = vadd.f32 %v117, %v137
    %v146 = vadd.f32 %v118, %v138
    %147 = vset.pattern.permute.xlu0 2
    %148 = vperm.xlu0 %147, %v91
    %v149 = vpop.permute.xlu0 %148
    %151 = vset.pattern.permute.xlu0 2
    %152 = vperm.xlu0 %151, %v92
    %v153 = vpop.permute.xlu0 %152
    %v155 = vperm.slane %v93, 2
    %v156 = vperm.slane %v94, 2
    %v157 = vperm.slane %v95, 2
    %v158 = vperm.slane %v96, 2
    %v159 = vmul.f32 %v149, %v155
    %v160 = vmul.f32 %v149, %v156
    %v161 = vmul.f32 %v149, %v157
    %v162 = vmul.f32 %v149, %v158
    %v163 = vmul.f32 %v153, %v155
    %v164 = vmul.f32 %v153, %v156
    %v165 = vmul.f32 %v153, %v157
    %v166 = vmul.f32 %v153, %v158
    %v167 = vadd.f32 %v139, %v159
    %v168 = vadd.f32 %v140, %v160
    %v169 = vadd.f32 %v141, %v161
    %v170 = vadd.f32 %v142, %v162
    %v171 = vadd.f32 %v143, %v163
    %v172 = vadd.f32 %v144, %v164
    %v173 = vadd.f32 %v145, %v165
    %v174 = vadd.f32 %v146, %v166
    %175 = vset.pattern.permute.xlu0 3
    %176 = vperm.xlu0 %175, %v91
    %v177 = vpop.permute.xlu0 %176
    %179 = vset.pattern.permute.xlu0 3
    %180 = vperm.xlu0 %179, %v92
    %v181 = vpop.permute.xlu0 %180
    %v183 = vperm.slane %v93, 3
    %v184 = vperm.slane %v94, 3
    %v185 = vperm.slane %v95, 3
    %v186 = vperm.slane %v96, 3
    %v187 = vmul.f32 %v177, %v183
    %v188 = vmul.f32 %v177, %v184
    %v189 = vmul.f32 %v177, %v185
    %v190 = vmul.f32 %v177, %v186
    %v191 = vmul.f32 %v181, %v183
    %v192 = vmul.f32 %v181, %v184
    %v193 = vmul.f32 %v181, %v185
    %v194 = vmul.f32 %v181, %v186
    %v195 = vadd.f32 %v167, %v187
    %v196 = vadd.f32 %v168, %v188
    %v197 = vadd.f32 %v169, %v189
    %v198 = vadd.f32 %v170, %v190
    %v199 = vadd.f32 %v171, %v191
    %v200 = vadd.f32 %v172, %v192
    %v201 = vadd.f32 %v173, %v193
    %v202 = vadd.f32 %v174, %v194
    %203 = vset.pattern.permute.xlu0 4
    %204 = vperm.xlu0 %203, %v91
    %v205 = vpop.permute.xlu0 %204
    %207 = vset.pattern.permute.xlu0 4
    %208 = vperm.xlu0 %207, %v92
    %v209 = vpop.permute.xlu0 %208
    %v211 = vperm.slane %v93, 4
    %v212 = vperm.slane %v94, 4
    %v213 = vperm.slane %v95, 4
    %v214 = vperm.slane %v96, 4
    %v215 = vmul.f32 %v205, %v211
    %v216 = vmul.f32 %v205, %v212
    %v217 = vmul.f32 %v205, %v213
    %v218 = vmul.f32 %v205, %v214
    %v219 = vmul.f32 %v209, %v211
    %v220 = vmul.f32 %v209, %v212
    %v221 = vmul.f32 %v209, %v213
    %v222 = vmul.f32 %v209, %v214
    %v223 = vadd.f32 %v195, %v215
    %v224 = vadd.f32 %v196, %v216
    %v225 = vadd.f32 %v197, %v217
    %v226 = vadd.f32 %v198, %v218
    %v227 = vadd.f32 %v199, %v219
    %v228 = vadd.f32 %v200, %v220
    %v229 = vadd.f32 %v201, %v221
    %v230 = vadd.f32 %v202, %v222
    %231 = vset.pattern.permute.xlu0 5
    %232 = vperm.xlu0 %231, %v91
    %v233 = vpop.permute.xlu0 %232
    %235 = vset.pattern.permute.xlu0 5
    %236 = vperm.xlu0 %235, %v92
    %v237 = vpop.permute.xlu0 %236
    %v239 = vperm.slane %v93, 5
    %v240 = vperm.slane %v94, 5
    %v241 = vperm.slane %v95, 5
    %v242 = vperm.slane %v96, 5
    %v243 = vmul.f32 %v233, %v239
    %v244 = vmul.f32 %v233, %v240
    %v245 = vmul.f32 %v233, %v241
    %v246 = vmul.f32 %v233, %v242
    %v247 = vmul.f32 %v237, %v239
    %v248 = vmul.f32 %v237, %v240
    %v249 = vmul.f32 %v237, %v241
    %v250 = vmul.f32 %v237, %v242
    %v251 = vadd.f32 %v223, %v243
    %v252 = vadd.f32 %v224, %v244
    %v253 = vadd.f32 %v225, %v245
    %v254 = vadd.f32 %v226, %v246
    %v255 = vadd.f32 %v227, %v247
    %v256 = vadd.f32 %v228, %v248
    %v257 = vadd.f32 %v229, %v249
    %v258 = vadd.f32 %v230, %v250
    %259 = vset.pattern.permute.xlu0 6
    %260 = vperm.xlu0 %259, %v91
    %v261 = vpop.permute.xlu0 %260
    %263 = vset.pattern.permute.xlu0 6
    %264 = vperm.xlu0 %263, %v92
    %v265 = vpop.permute.xlu0 %264
    %v267 = vperm.slane %v93, 6
    %v268 = vperm.slane %v94, 6
    %v269 = vperm.slane %v95, 6
    %v270 = vperm.slane %v96, 6
    %v271 = vmul.f32 %v261, %v267
    %v272 = vmul.f32 %v261, %v268
    %v273 = vmul.f32 %v261, %v269
    %v274 = vmul.f32 %v261, %v270
    %v275 = vmul.f32 %v265, %v267
    %v276 = vmul.f32 %v265, %v268
    %v277 = vmul.f32 %v265, %v269
    %v278 = vmul.f32 %v265, %v270
    %v279 = vadd.f32 %v251, %v271
    %v280 = vadd.f32 %v252, %v272
    %v281 = vadd.f32 %v253, %v273
    %v282 = vadd.f32 %v254, %v274
    %v283 = vadd.f32 %v255, %v275
    %v284 = vadd.f32 %v256, %v276
    %v285 = vadd.f32 %v257, %v277
    %v286 = vadd.f32 %v258, %v278
    %v287 = vmax.f32 %v279, 0.0
    %v288 = vmax.f32 %v280, 0.0
    %v289 = vmax.f32 %v281, 0.0
    %v290 = vmax.f32 %v282, 0.0
    %v291 = vmax.f32 %v283, 0.0
    %v292 = vmax.f32 %v284, 0.0
    %v293 = vmax.f32 %v285, 0.0
    %v294 = vmax.f32 %v286, 0.0
    %v295 = vpack.c.bf16 %v291, %v287
    %v296 = vpack.c.bf16 %v292, %v288
    %v297 = vpack.c.bf16 %v293, %v289
    %v298 = vpack.c.bf16 %v294, %v290
    %v299 = vld [vmem:[#allocation5] sm:$0xff]
    %v300 = vld [vmem:[#allocation5 + $0x8] sm:$0xff]
    %v301 = vld [vmem:[#allocation5 + $0x10] sm:$0xff]
    %v302 = vld [vmem:[#allocation5 + $0x18] sm:$0xff]
    %v303 = vld [vmem:[#allocation5 + $0x20] sm:$0xff]
    %v304 = vld [vmem:[#allocation5 + $0x28] sm:$0xff]
    %v305 = vld [vmem:[#allocation5 + $0x30] sm:$0xff]
    %v306 = vld [vmem:[#allocation5 + $0x38] sm:$0xff]
    %v307 = vld [vmem:[#allocation5 + $0x40] sm:$0xff]
    %v308 = vld [vmem:[#allocation5 + $0x48] sm:$0xff]
    %v309 = vld [vmem:[#allocation5 + $0x50] sm:$0xff]
    %v310 = vld [vmem:[#allocation5 + $0x58] sm:$0xff]
    %v311 = vld [vmem:[#allocation5 + $0x60] sm:$0xff]
    %v312 = vld [vmem:[#allocation5 + $0x68] sm:$0xff]
    %v313 = vld [vmem:[#allocation5 + $0x70] sm:$0xff]
    %v314 = vld [vmem:[#allocation5 + $0x78] sm:$0xff]
    %v315 = vld [vmem:[#allocation5 + $0x80] sm:$0xff]
    %v316 = vld [vmem:[#allocation5 + $0x88] sm:$0xff]
    %v317 = vld [vmem:[#allocation5 + $0x90] sm:$0xff]
    %v318 = vld [vmem:[#allocation5 + $0x98] sm:$0xff]
    %v319 = vld [vmem:[#allocation5 + $0xa0] sm:$0xff]
    %v320 = vld [vmem:[#allocation5 + $0xa8] sm:$0xff]
    %v321 = vld [vmem:[#allocation5 + $0xb0] sm:$0xff]
    %v322 = vld [vmem:[#allocation5 + $0xb8] sm:$0xff]
    %v323 = vld [vmem:[#allocation5 + $0xc0] sm:$0xff]
    %v324 = vld [vmem:[#allocation5 + $0xc8] sm:$0xff]
    %v325 = vld [vmem:[#allocation5 + $0xd0] sm:$0xff]
    %v326 = vld [vmem:[#allocation5 + $0xd8] sm:$0xff]
    %v327 = vld [vmem:[#allocation5 + $0xe0] sm:$0xff]
    %v328 = vld [vmem:[#allocation5 + $0xe8] sm:$0xff]
    %v329 = vld [vmem:[#allocation5 + $0xf0] sm:$0xff]
    %v330 = vld [vmem:[#allocation5 + $0xf8] sm:$0xff]
    %v331 = vld [vmem:[#allocation5 + $0x100] sm:$0xff]
    %v332 = vld [vmem:[#allocation5 + $0x108] sm:$0xff]
    %v333 = vld [vmem:[#allocation5 + $0x110] sm:$0xff]
    %v334 = vld [vmem:[#allocation5 + $0x118] sm:$0xff]
    %v335 = vld [vmem:[#allocation5 + $0x120] sm:$0xff]
    %v336 = vld [vmem:[#allocation5 + $0x128] sm:$0xff]
    %v337 = vld [vmem:[#allocation5 + $0x130] sm:$0xff]
    %v338 = vld [vmem:[#allocation5 + $0x138] sm:$0xff]
    %v339 = vld [vmem:[#allocation5 + $0x140] sm:$0xff]
    %v340 = vld [vmem:[#allocation5 + $0x148] sm:$0xff]
    %v341 = vld [vmem:[#allocation5 + $0x150] sm:$0xff]
    %v342 = vld [vmem:[#allocation5 + $0x158] sm:$0xff]
    %v343 = vld [vmem:[#allocation5 + $0x160] sm:$0xff]
    %v344 = vld [vmem:[#allocation5 + $0x168] sm:$0xff]
    %v345 = vld [vmem:[#allocation5 + $0x170] sm:$0xff]
    %v346 = vld [vmem:[#allocation5 + $0x178] sm:$0xff]
    %v347 = vld [vmem:[#allocation5 + $0x180] sm:$0xff]
    %v348 = vld [vmem:[#allocation5 + $0x188] sm:$0xff]
    %v349 = vld [vmem:[#allocation5 + $0x190] sm:$0xff]
    %v350 = vld [vmem:[#allocation5 + $0x198] sm:$0xff]
    %v351 = vld [vmem:[#allocation5 + $0x1a0] sm:$0xff]
    %v352 = vld [vmem:[#allocation5 + $0x1a8] sm:$0xff]
    %v353 = vld [vmem:[#allocation5 + $0x1b0] sm:$0xff]
    %v354 = vld [vmem:[#allocation5 + $0x1b8] sm:$0xff]
    %v355 = vld [vmem:[#allocation5 + $0x1c0] sm:$0xff]
    %v356 = vld [vmem:[#allocation5 + $0x1c8] sm:$0xff]
    %v357 = vld [vmem:[#allocation5 + $0x1d0] sm:$0xff]
    %v358 = vld [vmem:[#allocation5 + $0x1d8] sm:$0xff]
    %v359 = vld [vmem:[#allocation5 + $0x1e0] sm:$0xff]
    %v360 = vld [vmem:[#allocation5 + $0x1e8] sm:$0xff]
    %v361 = vld [vmem:[#allocation5 + $0x1f0] sm:$0xff]
    %v362 = vld [vmem:[#allocation5 + $0x1f8] sm:$0xff]
    %v363 = vld [vmem:[%s3] sm:$0x3]
    %v364 = vunpack.c.l.bf16 %v363
    %v366 = vperm.slane %v364, 0
    %v367 = vperm.slane %v364, 2
    %v370 = vperm.slane %v366, 0
    %v371 = vperm.slane %v367, 0
    %v436 = vunpack.c.l.b16 %v299
    %v437 = vunpack.c.h.b16 %v299
    %v438 = vunpack.c.l.b16 %v300
    %v439 = vunpack.c.h.b16 %v300
    %v440 = vunpack.c.l.b16 %v301
    %v441 = vunpack.c.h.b16 %v301
    %v442 = vunpack.c.l.b16 %v302
    %v443 = vunpack.c.h.b16 %v302
    %v444 = vunpack.c.l.b16 %v303
    %v445 = vunpack.c.h.b16 %v303
    %v446 = vunpack.c.l.b16 %v304
    %v447 = vunpack.c.h.b16 %v304
    %v448 = vunpack.c.l.b16 %v305
    %v449 = vunpack.c.h.b16 %v305
    %v450 = vunpack.c.l.b16 %v306
    %v451 = vunpack.c.h.b16 %v306
    %v452 = vunpack.c.l.b16 %v307
    %v453 = vunpack.c.h.b16 %v307
    %v454 = vunpack.c.l.b16 %v308
    %v455 = vunpack.c.h.b16 %v308
    %v456 = vunpack.c.l.b16 %v309
    %v457 = vunpack.c.h.b16 %v309
    %v458 = vunpack.c.l.b16 %v310
    %v459 = vunpack.c.h.b16 %v310
    %v460 = vunpack.c.l.b16 %v311
    %v461 = vunpack.c.h.b16 %v311
    %v462 = vunpack.c.l.b16 %v312
    %v463 = vunpack.c.h.b16 %v312
    %v464 = vunpack.c.l.b16 %v313
    %v465 = vunpack.c.h.b16 %v313
    %v466 = vunpack.c.l.b16 %v314
    %v467 = vunpack.c.h.b16 %v314
    %v468 = vunpack.c.l.b16 %v315
    %v469 = vunpack.c.h.b16 %v315
    %v470 = vunpack.c.l.b16 %v316
    %v471 = vunpack.c.h.b16 %v316
    %v472 = vunpack.c.l.b16 %v317
    %v473 = vunpack.c.h.b16 %v317
    %v474 = vunpack.c.l.b16 %v318
    %v475 = vunpack.c.h.b16 %v318
    %v476 = vunpack.c.l.b16 %v319
    %v477 = vunpack.c.h.b16 %v319
    %v478 = vunpack.c.l.b16 %v320
    %v479 = vunpack.c.h.b16 %v320
    %v480 = vunpack.c.l.b16 %v321
    %v481 = vunpack.c.h.b16 %v321
    %v482 = vunpack.c.l.b16 %v322
    %v483 = vunpack.c.h.b16 %v322
    %v484 = vunpack.c.l.b16 %v323
    %v485 = vunpack.c.h.b16 %v323
    %v486 = vunpack.c.l.b16 %v324
    %v487 = vunpack.c.h.b16 %v324
    %v488 = vunpack.c.l.b16 %v325
    %v489 = vunpack.c.h.b16 %v325
    %v490 = vunpack.c.l.b16 %v326
    %v491 = vunpack.c.h.b16 %v326
    %v492 = vunpack.c.l.b16 %v327
    %v493 = vunpack.c.h.b16 %v327
    %v494 = vunpack.c.l.b16 %v328
    %v495 = vunpack.c.h.b16 %v328
    %v496 = vunpack.c.l.b16 %v329
    %v497 = vunpack.c.h.b16 %v329
    %v498 = vunpack.c.l.b16 %v330
    %v499 = vunpack.c.h.b16 %v330
    %v500 = vunpack.c.l.b16 %v331
    %v501 = vunpack.c.h.b16 %v331
    %v502 = vunpack.c.l.b16 %v332
    %v503 = vunpack.c.h.b16 %v332
    %v504 = vunpack.c.l.b16 %v333
    %v505 = vunpack.c.h.b16 %v333
    %v506 = vunpack.c.l.b16 %v334
    %v507 = vunpack.c.h.b16 %v334
    %v508 = vunpack.c.l.b16 %v335
    %v509 = vunpack.c.h.b16 %v335
    %v510 = vunpack.c.l.b16 %v336
    %v511 = vunpack.c.h.b16 %v336
    %v512 = vunpack.c.l.b16 %v337
    %v513 = vunpack.c.h.b16 %v337
    %v514 = vunpack.c.l.b16 %v338
    %v515 = vunpack.c.h.b16 %v338
    %v516 = vunpack.c.l.b16 %v339
    %v517 = vunpack.c.h.b16 %v339
    %v518 = vunpack.c.l.b16 %v340
    %v519 = vunpack.c.h.b16 %v340
    %v520 = vunpack.c.l.b16 %v341
    %v521 = vunpack.c.h.b16 %v341
    %v522 = vunpack.c.l.b16 %v342
    %v523 = vunpack.c.h.b16 %v342
    %v524 = vunpack.c.l.b16 %v343
    %v525 = vunpack.c.h.b16 %v343
    %v526 = vunpack.c.l.b16 %v344
    %v527 = vunpack.c.h.b16 %v344
    %v528 = vunpack.c.l.b16 %v345
    %v529 = vunpack.c.h.b16 %v345
    %v530 = vunpack.c.l.b16 %v346
    %v531 = vunpack.c.h.b16 %v346
    %v532 = vunpack.c.l.b16 %v347
    %v533 = vunpack.c.h.b16 %v347
    %v534 = vunpack.c.l.b16 %v348
    %v535 = vunpack.c.h.b16 %v348
    %v536 = vunpack.c.l.b16 %v349
    %v537 = vunpack.c.h.b16 %v349
    %v538 = vunpack.c.l.b16 %v350
    %v539 = vunpack.c.h.b16 %v350
    %v540 = vunpack.c.l.b16 %v351
    %v541 = vunpack.c.h.b16 %v351
    %v542 = vunpack.c.l.b16 %v352
    %v543 = vunpack.c.h.b16 %v352
    %v544 = vunpack.c.l.b16 %v353
    %v545 = vunpack.c.h.b16 %v353
    %v546 = vunpack.c.l.b16 %v354
    %v547 = vunpack.c.h.b16 %v354
    %v548 = vunpack.c.l.b16 %v355
    %v549 = vunpack.c.h.b16 %v355
    %v550 = vunpack.c.l.b16 %v356
    %v551 = vunpack.c.h.b16 %v356
    %v552 = vunpack.c.l.b16 %v357
    %v553 = vunpack.c.h.b16 %v357
    %v554 = vunpack.c.l.b16 %v358
    %v555 = vunpack.c.h.b16 %v358
    %v556 = vunpack.c.l.b16 %v359
    %v557 = vunpack.c.h.b16 %v359
    %v558 = vunpack.c.l.b16 %v360
    %v559 = vunpack.c.h.b16 %v360
    %v560 = vunpack.c.l.b16 %v361
    %v561 = vunpack.c.h.b16 %v361
    %v562 = vunpack.c.l.b16 %v362
    %v563 = vunpack.c.h.b16 %v362
    %v564 = vpack.c.b16 %v438, %v436
    %v565 = vpack.c.b16 %v439, %v437
    %v566 = vpack.c.b16 %v442, %v440
    %v567 = vpack.c.b16 %v443, %v441
    %v568 = vpack.c.b16 %v446, %v444
    %v569 = vpack.c.b16 %v447, %v445
    %v570 = vpack.c.b16 %v450, %v448
    %v571 = vpack.c.b16 %v451, %v449
    %v572 = vpack.c.b16 %v454, %v452
    %v573 = vpack.c.b16 %v455, %v453
    %v574 = vpack.c.b16 %v458, %v456
    %v575 = vpack.c.b16 %v459, %v457
    %v576 = vpack.c.b16 %v462, %v460
    %v577 = vpack.c.b16 %v463, %v461
    %v578 = vpack.c.b16 %v466, %v464
    %v579 = vpack.c.b16 %v467, %v465
    %v580 = vpack.c.b16 %v470, %v468
    %v581 = vpack.c.b16 %v471, %v469
    %v582 = vpack.c.b16 %v474, %v472
    %v583 = vpack.c.b16 %v475, %v473
    %v584 = vpack.c.b16 %v478, %v476
    %v585 = vpack.c.b16 %v479, %v477
    %v586 = vpack.c.b16 %v482, %v480
    %v587 = vpack.c.b16 %v483, %v481
    %v588 = vpack.c.b16 %v486, %v484
    %v589 = vpack.c.b16 %v487, %v485
    %v590 = vpack.c.b16 %v490, %v488
    %v591 = vpack.c.b16 %v491, %v489
    %v592 = vpack.c.b16 %v494, %v492
    %v593 = vpack.c.b16 %v495, %v493
    %v594 = vpack.c.b16 %v498, %v496
    %v595 = vpack.c.b16 %v499, %v497
    %v596 = vpack.c.b16 %v502, %v500
    %v597 = vpack.c.b16 %v503, %v501
    %v598 = vpack.c.b16 %v506, %v504
    %v599 = vpack.c.b16 %v507, %v505
    %v600 = vpack.c.b16 %v510, %v508
    %v601 = vpack.c.b16 %v511, %v509
    %v602 = vpack.c.b16 %v514, %v512
    %v603 = vpack.c.b16 %v515, %v513
    %v604 = vpack.c.b16 %v518, %v516
    %v605 = vpack.c.b16 %v519, %v517
    %v606 = vpack.c.b16 %v522, %v520
    %v607 = vpack.c.b16 %v523, %v521
    %v608 = vpack.c.b16 %v526, %v524
    %v609 = vpack.c.b16 %v527, %v525
    %v610 = vpack.c.b16 %v530, %v528
    %v611 = vpack.c.b16 %v531, %v529
    %v612 = vpack.c.b16 %v534, %v532
    %v613 = vpack.c.b16 %v535, %v533
    %v614 = vpack.c.b16 %v538, %v536
    %v615 = vpack.c.b16 %v539, %v537
    %v616 = vpack.c.b16 %v542, %v540
    %v617 = vpack.c.b16 %v543, %v541
    %v618 = vpack.c.b16 %v546, %v544
    %v619 = vpack.c.b16 %v547, %v545
    %v620 = vpack.c.b16 %v550, %v548
    %v621 = vpack.c.b16 %v551, %v549
    %v622 = vpack.c.b16 %v554, %v552
    %v623 = vpack.c.b16 %v555, %v553
    %v624 = vpack.c.b16 %v558, %v556
    %v625 = vpack.c.b16 %v559, %v557
    %v626 = vpack.c.b16 %v562, %v560
    %v627 = vpack.c.b16 %v563, %v561
    %692 = vmatpush.bf16.msra.mxu0 %v578
    %693 = vmatpush.bf16.msra.mxu0 %v576
    %694 = vmatpush.bf16.msra.mxu0 %v574
    %695 = vmatpush.bf16.msra.mxu0 %v572
    %696 = vmatpush.bf16.msra.mxu0 %v570
    %697 = vmatpush.bf16.msra.mxu0 %v568
    %698 = vmatpush.bf16.msra.mxu0 %v566
    %699 = vmatpush.bf16.msra.mxu0 %v564
    %700 = vmatmul.bf16.gmra.mxu0 %v295
    %v701 = vpop.f32.mrf.mxu0
    %v702 = vadd.f32 %v370, %v701
    %v703 = vpop.f32.mrf.mxu0
    %v704 = vadd.f32 %v370, %v703
    %705 = vdwg.mxu0
    %706 = vmatpush.bf16.msra.mxu0 %v594
    %707 = vmatpush.bf16.msra.mxu0 %v592
    %708 = vmatpush.bf16.msra.mxu0 %v590
    %709 = vmatpush.bf16.msra.mxu0 %v588
    %710 = vmatpush.bf16.msra.mxu0 %v586
    %711 = vmatpush.bf16.msra.mxu0 %v584
    %712 = vmatpush.bf16.msra.mxu0 %v582
    %713 = vmatpush.bf16.msra.mxu0 %v580
    %714 = vmatmul.bf16.gmra.mxu0 %v296
    %v715 = vpop.f32.mrf.mxu0
    %v716 = vadd.f32 %v702, %v715
    %v717 = vpop.f32.mrf.mxu0
    %v718 = vadd.f32 %v704, %v717
    %719 = vdwg.mxu0
    %720 = vmatpush.bf16.msra.mxu0 %v610
    %721 = vmatpush.bf16.msra.mxu0 %v608
    %722 = vmatpush.bf16.msra.mxu0 %v606
    %723 = vmatpush.bf16.msra.mxu0 %v604
    %724 = vmatpush.bf16.msra.mxu0 %v602
    %725 = vmatpush.bf16.msra.mxu0 %v600
    %726 = vmatpush.bf16.msra.mxu0 %v598
    %727 = vmatpush.bf16.msra.mxu0 %v596
    %728 = vmatmul.bf16.gmra.mxu0 %v297
    %v729 = vpop.f32.mrf.mxu0
    %v730 = vadd.f32 %v716, %v729
    %v731 = vpop.f32.mrf.mxu0
    %v732 = vadd.f32 %v718, %v731
    %733 = vdwg.mxu0
    %734 = vmatpush.bf16.msra.mxu0 %v626
    %735 = vmatpush.bf16.msra.mxu0 %v624
    %736 = vmatpush.bf16.msra.mxu0 %v622
    %737 = vmatpush.bf16.msra.mxu0 %v620
    %738 = vmatpush.bf16.msra.mxu0 %v618
    %739 = vmatpush.bf16.msra.mxu0 %v616
    %740 = vmatpush.bf16.msra.mxu0 %v614
    %741 = vmatpush.bf16.msra.mxu0 %v612
    %742 = vmatmul.bf16.gmra.mxu0 %v298
    %v743 = vpop.f32.mrf.mxu0
    %v744 = vadd.f32 %v730, %v743
    %v745 = vpop.f32.mrf.mxu0
    %v746 = vadd.f32 %v732, %v745
    %747 = vdwg.mxu0
    %748 = vmatpush.bf16.msra.mxu0 %v579
    %749 = vmatpush.bf16.msra.mxu0 %v577
    %750 = vmatpush.bf16.msra.mxu0 %v575
    %751 = vmatpush.bf16.msra.mxu0 %v573
    %752 = vmatpush.bf16.msra.mxu0 %v571
    %753 = vmatpush.bf16.msra.mxu0 %v569
    %754 = vmatpush.bf16.msra.mxu0 %v567
    %755 = vmatpush.bf16.msra.mxu0 %v565
    %756 = vmatmul.bf16.gmra.mxu0 %v295
    %v757 = vpop.f32.mrf.mxu0
    %v758 = vadd.f32 %v371, %v757
    %v759 = vpop.f32.mrf.mxu0
    %v760 = vadd.f32 %v371, %v759
    %761 = vdwg.mxu0
    %762 = vmatpush.bf16.msra.mxu0 %v595
    %763 = vmatpush.bf16.msra.mxu0 %v593
    %764 = vmatpush.bf16.msra.mxu0 %v591
    %765 = vmatpush.bf16.msra.mxu0 %v589
    %766 = vmatpush.bf16.msra.mxu0 %v587
    %767 = vmatpush.bf16.msra.mxu0 %v585
    %768 = vmatpush.bf16.msra.mxu0 %v583
    %769 = vmatpush.bf16.msra.mxu0 %v581
    %770 = vmatmul.bf16.gmra.mxu0 %v296
    %v771 = vpop.f32.mrf.mxu0
    %v772 = vadd.f32 %v758, %v771
    %v773 = vpop.f32.mrf.mxu0
    %v774 = vadd.f32 %v760, %v773
    %775 = vdwg.mxu0
    %776 = vmatpush.bf16.msra.mxu0 %v611
    %777 = vmatpush.bf16.msra.mxu0 %v609
    %778 = vmatpush.bf16.msra.mxu0 %v607
    %779 = vmatpush.bf16.msra.mxu0 %v605
    %780 = vmatpush.bf16.msra.mxu0 %v603
    %781 = vmatpush.bf16.msra.mxu0 %v601
    %782 = vmatpush.bf16.msra.mxu0 %v599
    %783 = vmatpush.bf16.msra.mxu0 %v597
    %784 = vmatmul.bf16.gmra.mxu0 %v297
    %v785 = vpop.f32.mrf.mxu0
    %v786 = vadd.f32 %v772, %v785
    %v787 = vpop.f32.mrf.mxu0
    %v788 = vadd.f32 %v774, %v787
    %789 = vdwg.mxu0
    %790 = vmatpush.bf16.msra.mxu0 %v627
    %791 = vmatpush.bf16.msra.mxu0 %v625
    %792 = vmatpush.bf16.msra.mxu0 %v623
    %793 = vmatpush.bf16.msra.mxu0 %v621
    %794 = vmatpush.bf16.msra.mxu0 %v619
    %795 = vmatpush.bf16.msra.mxu0 %v617
    %796 = vmatpush.bf16.msra.mxu0 %v615
    %797 = vmatpush.bf16.msra.mxu0 %v613
    %798 = vmatmul.bf16.gmra.mxu0 %v298
    %v799 = vpop.f32.mrf.mxu0
    %v800 = vadd.f32 %v786, %v799
    %v801 = vpop.f32.mrf.mxu0
    %v802 = vadd.f32 %v788, %v801
    %803 = vdwg.mxu0
    %v804 = vmax.f32 %v744, 0.0
    %v805 = vmax.f32 %v800, 0.0
    %v806 = vmax.f32 %v746, 0.0
    %v807 = vmax.f32 %v802, 0.0
    %v808 = vpack.c.bf16 %v806, %v804
    %v809 = vpack.c.bf16 %v807, %v805
    %v810 = vld [vmem:[#allocation7] sm:$0xf]
    %v811 = vld [vmem:[#allocation7 + $0x4] sm:$0xf]
    %v812 = vld [vmem:[#allocation7 + $0x8] sm:$0xf]
    %v813 = vld [vmem:[#allocation7 + $0xc] sm:$0xf]
    %v814 = vld [vmem:[#allocation7 + $0x10] sm:$0xf]
    %v815 = vld [vmem:[#allocation7 + $0x14] sm:$0xf]
    %v816 = vld [vmem:[#allocation7 + $0x18] sm:$0xf]
    %v817 = vld [vmem:[#allocation7 + $0x1c] sm:$0xf]
    %v818 = vld [vmem:[#allocation7 + $0x20] sm:$0xf]
    %v819 = vld [vmem:[#allocation7 + $0x24] sm:$0xf]
    %v820 = vld [vmem:[#allocation7 + $0x28] sm:$0xf]
    %v821 = vld [vmem:[#allocation7 + $0x2c] sm:$0xf]
    %v822 = vld [vmem:[#allocation7 + $0x30] sm:$0xf]
    %v823 = vld [vmem:[#allocation7 + $0x34] sm:$0xf]
    %v824 = vld [vmem:[#allocation7 + $0x38] sm:$0xf]
    %v825 = vld [vmem:[#allocation7 + $0x3c] sm:$0xf]
    %v826 = vld [vmem:[#allocation7 + $0x40] sm:$0xf]
    %v827 = vld [vmem:[#allocation7 + $0x44] sm:$0xf]
    %v828 = vld [vmem:[#allocation7 + $0x48] sm:$0xf]
    %v829 = vld [vmem:[#allocation7 + $0x4c] sm:$0xf]
    %v830 = vld [vmem:[#allocation7 + $0x50] sm:$0xf]
    %v831 = vld [vmem:[#allocation7 + $0x54] sm:$0xf]
    %v832 = vld [vmem:[#allocation7 + $0x58] sm:$0xf]
    %v833 = vld [vmem:[#allocation7 + $0x5c] sm:$0xf]
    %v834 = vld [vmem:[#allocation7 + $0x60] sm:$0xf]
    %v835 = vld [vmem:[#allocation7 + $0x64] sm:$0xf]
    %v836 = vld [vmem:[#allocation7 + $0x68] sm:$0xf]
    %v837 = vld [vmem:[#allocation7 + $0x6c] sm:$0xf]
    %v838 = vld [vmem:[#allocation7 + $0x70] sm:$0xf]
    %v839 = vld [vmem:[#allocation7 + $0x74] sm:$0xf]
    %v840 = vld [vmem:[#allocation7 + $0x78] sm:$0xf]
    %v841 = vld [vmem:[#allocation7 + $0x7c] sm:$0xf]
    %v842 = vld [vmem:[%s5] sm:$0x1]
    %v843 = vunpack.c.l.bf16 %v842
    %v844 = vperm.slane %v843, 0
    %v877 = vunpack.c.l.b16 %v810
    %v878 = vunpack.c.l.b16 %v811
    %v879 = vunpack.c.l.b16 %v812
    %v880 = vunpack.c.l.b16 %v813
    %v881 = vunpack.c.l.b16 %v814
    %v882 = vunpack.c.l.b16 %v815
    %v883 = vunpack.c.l.b16 %v816
    %v884 = vunpack.c.l.b16 %v817
    %v885 = vunpack.c.l.b16 %v818
    %v886 = vunpack.c.l.b16 %v819
    %v887 = vunpack.c.l.b16 %v820
    %v888 = vunpack.c.l.b16 %v821
    %v889 = vunpack.c.l.b16 %v822
    %v890 = vunpack.c.l.b16 %v823
    %v891 = vunpack.c.l.b16 %v824
    %v892 = vunpack.c.l.b16 %v825
    %v893 = vunpack.c.l.b16 %v826
    %v894 = vunpack.c.l.b16 %v827
    %v895 = vunpack.c.l.b16 %v828
    %v896 = vunpack.c.l.b16 %v829
    %v897 = vunpack.c.l.b16 %v830
    %v898 = vunpack.c.l.b16 %v831
    %v899 = vunpack.c.l.b16 %v832
    %v900 = vunpack.c.l.b16 %v833
    %v901 = vunpack.c.l.b16 %v834
    %v902 = vunpack.c.l.b16 %v835
    %v903 = vunpack.c.l.b16 %v836
    %v904 = vunpack.c.l.b16 %v837
    %v905 = vunpack.c.l.b16 %v838
    %v906 = vunpack.c.l.b16 %v839
    %v907 = vunpack.c.l.b16 %v840
    %v908 = vunpack.c.l.b16 %v841
    %v909 = vpack.c.b16 %v878, %v877
    %v910 = vpack.c.b16 %v880, %v879
    %v911 = vpack.c.b16 %v882, %v881
    %v912 = vpack.c.b16 %v884, %v883
    %v913 = vpack.c.b16 %v886, %v885
    %v914 = vpack.c.b16 %v888, %v887
    %v915 = vpack.c.b16 %v890, %v889
    %v916 = vpack.c.b16 %v892, %v891
    %v917 = vpack.c.b16 %v894, %v893
    %v918 = vpack.c.b16 %v896, %v895
    %v919 = vpack.c.b16 %v898, %v897
    %v920 = vpack.c.b16 %v900, %v899
    %v921 = vpack.c.b16 %v902, %v901
    %v922 = vpack.c.b16 %v904, %v903
    %v923 = vpack.c.b16 %v906, %v905
    %v924 = vpack.c.b16 %v908, %v907
    %941 = vmatpush.bf16.msra.mxu0 %v916
    %942 = vmatpush.bf16.msra.mxu0 %v915
    %943 = vmatpush.bf16.msra.mxu0 %v914
    %944 = vmatpush.bf16.msra.mxu0 %v913
    %945 = vmatpush.bf16.msra.mxu0 %v912
    %946 = vmatpush.bf16.msra.mxu0 %v911
    %947 = vmatpush.bf16.msra.mxu0 %v910
    %948 = vmatpush.bf16.msra.mxu0 %v909
    %949 = vmatmul.bf16.gmra.mxu0 %v808
    %v950 = vpop.f32.mrf.mxu0
    %v951 = vadd.f32 %v844, %v950
    %v952 = vpop.f32.mrf.mxu0
    %v953 = vadd.f32 %v844, %v952
    %954 = vdwg.mxu0
    %955 = vmatpush.bf16.msra.mxu0 %v924
    %956 = vmatpush.bf16.msra.mxu0 %v923
    %957 = vmatpush.bf16.msra.mxu0 %v922
    %958 = vmatpush.bf16.msra.mxu0 %v921
    %959 = vmatpush.bf16.msra.mxu0 %v920
    %960 = vmatpush.bf16.msra.mxu0 %v919
    %961 = vmatpush.bf16.msra.mxu0 %v918
    %962 = vmatpush.bf16.msra.mxu0 %v917
    %963 = vmatmul.bf16.gmra.mxu0 %v809
    %v964 = vpop.f32.mrf.mxu0
    %v965 = vadd.f32 %v951, %v964
    %v966 = vpop.f32.mrf.mxu0
    %v967 = vadd.f32 %v953, %v966
    %968 = vdwg.mxu0
    %v969 = vmax.f32 %v965, 0.0
    %v970 = vmax.f32 %v967, 0.0
    %v971 = vpack.c.bf16 %v970, %v969
    %v972 = vld [vmem:[#allocation8] sm:$0xf]
    %v973 = vld [vmem:[#allocation8 + $0x4] sm:$0xf]
    %v974 = vld [vmem:[#allocation8 + $0x8] sm:$0xf]
    %v975 = vld [vmem:[#allocation8 + $0xc] sm:$0xf]
    %v976 = vld [vmem:[#allocation8 + $0x10] sm:$0xf]
    %v977 = vld [vmem:[#allocation8 + $0x14] sm:$0xf]
    %v978 = vld [vmem:[#allocation8 + $0x18] sm:$0xf]
    %v979 = vld [vmem:[#allocation8 + $0x1c] sm:$0xf]
    %v980 = vld [vmem:[#allocation8 + $0x20] sm:$0xf]
    %v981 = vld [vmem:[#allocation8 + $0x24] sm:$0xf]
    %v982 = vld [vmem:[#allocation8 + $0x28] sm:$0xf]
    %v983 = vld [vmem:[#allocation8 + $0x2c] sm:$0xf]
    %v984 = vld [vmem:[#allocation8 + $0x30] sm:$0xf]
    %v985 = vld [vmem:[#allocation8 + $0x34] sm:$0xf]
    %v986 = vld [vmem:[#allocation8 + $0x38] sm:$0xf]
    %v987 = vld [vmem:[#allocation8 + $0x3c] sm:$0xf]
    %v988 = vld [vmem:[%s7] sm:$0x1]
    %v989 = vunpack.c.l.bf16 %v988
    %v990 = vperm.slane %v989, 0
    %v1007 = vunpack.c.l.b16 %v972
    %v1008 = vunpack.c.l.b16 %v973
    %v1009 = vunpack.c.l.b16 %v974
    %v1010 = vunpack.c.l.b16 %v975
    %v1011 = vunpack.c.l.b16 %v976
    %v1012 = vunpack.c.l.b16 %v977
    %v1013 = vunpack.c.l.b16 %v978
    %v1014 = vunpack.c.l.b16 %v979
    %v1015 = vunpack.c.l.b16 %v980
    %v1016 = vunpack.c.l.b16 %v981
    %v1017 = vunpack.c.l.b16 %v982
    %v1018 = vunpack.c.l.b16 %v983
    %v1019 = vunpack.c.l.b16 %v984
    %v1020 = vunpack.c.l.b16 %v985
    %v1021 = vunpack.c.l.b16 %v986
    %v1022 = vunpack.c.l.b16 %v987
    %v1023 = vpack.c.b16 %v1008, %v1007
    %v1024 = vpack.c.b16 %v1010, %v1009
    %v1025 = vpack.c.b16 %v1012, %v1011
    %v1026 = vpack.c.b16 %v1014, %v1013
    %v1027 = vpack.c.b16 %v1016, %v1015
    %v1028 = vpack.c.b16 %v1018, %v1017
    %v1029 = vpack.c.b16 %v1020, %v1019
    %v1030 = vpack.c.b16 %v1022, %v1021
    %1039 = vmatpush.bf16.msra.mxu0 %v1030
    %1040 = vmatpush.bf16.msra.mxu0 %v1029
    %1041 = vmatpush.bf16.msra.mxu0 %v1028
    %1042 = vmatpush.bf16.msra.mxu0 %v1027
    %1043 = vmatpush.bf16.msra.mxu0 %v1026
    %1044 = vmatpush.bf16.msra.mxu0 %v1025
    %1045 = vmatpush.bf16.msra.mxu0 %v1024
    %1046 = vmatpush.bf16.msra.mxu0 %v1023
    %1047 = vmatmul.bf16.gmra.mxu0 %v971
    %v1048 = vpop.f32.mrf.mxu0
    %v1049 = vadd.f32 %v990, %v1048
    %v1050 = vpop.f32.mrf.mxu0
    %v1051 = vadd.f32 %v990, %v1050
    %1052 = vdwg.mxu0
    %v1053 = vmax.f32 %v1049, 0.0
    %v1054 = vmax.f32 %v1051, 0.0
    %v1055 = vpack.c.bf16 %v1053, %v1053
    %v1056 = vpack.c.bf16 %v1054, %v1054
    %1057 = vst [vmem:[#allocation10] sm:$0xf] %v1055
    %1058 = vst [vmem:[#allocation10 + $0x4] sm:$0xf] %v1056
    // Predicated region
    $region50: #{tpu_custom_call.1} parent=1 // pred_check
      _
    $region51: #{tpu_custom_call.1} parent=1 // pred_check_branch
      %1060 = sbr.rel (0) target = $region53
    $region52: #{tpu_custom_call.1} parent=1 // pred_region
      %1062 = vsyncadd [#allocation4], 0
      %s1063 = sshll.u32 [#allocation10], 4
      %s1064 = int_to_ptr.vmem [resolvable:$true] %s1063
      %s1065 = sshll.u32 %s8, 4
      %s1066 = int_to_ptr.hbm [resolvable:$true] %s1065
      %1071 = dma.vmem_to_hbm [thread:$0]  %s1064, 128, %s1066, [#allocation4], 64, 64, 4
    $region53: #{tpu_custom_call.1} parent=1 // pred_fallthru
      _
    // Predicated region
    $region54: #{tpu_custom_call.1} parent=1 // pred_check
      _
    $region55: #{tpu_custom_call.1} parent=1 // pred_check_branch
      %1073 = sbr.rel (0) target = $region57
    $region56: #{tpu_custom_call.1} parent=1 // pred_region
      %1075 = dma.done [#allocation4], 128
    $region57: #{tpu_custom_call.1} parent=1 // pred_fallthru
      _
    %1076 = vsyncpa [#allocation3], 1
    %1077 = vsyncpa [#allocation6], 1
    %1078 = vsyncpa [#allocation9], 1
    %1079 = vsyncpa [#allocation4], 1

</llo_original>
